<compile_context>
chip_gen: v5e
topology: v5e:2x2
jax: 0.10.0
libtpu: 0.0.40
codegen_flags: <defaults>
</compile_context>

<pallas_src>
import jax
import jax.numpy as jnp
from jax.experimental import pallas as pl
from jax.experimental.pallas import tpu as pltpu

CL_NUM = 20
IN_DIM = CL_NUM * 6          # 120
H1, H2, H3, OUT = 256, 128, 64, 3
H3_PAD = 128                 # lane-pad 64 -> 128 for the tail matmuls
OUT_PAD = 128                # W4/b4 padded to 128 lanes; result sliced to 3 in-kernel
DEFAULT_TILE_B = 2048        # rows per grid step (multiple of 8)


def _mlp_kernel(x_ref,
                w1_ref, b1_ref,
                w2_ref, b2_ref,
                w3_ref, b3_ref,
                w4_ref, b4_ref,
                o_ref):
    # One batch tile per grid step: 4 back-to-back MXU matmuls (bf16 inputs,
    # f32 accumulation); bias + ReLU in f32; narrow (tb, 3) f32 output store.
    x = x_ref[...].astype(jnp.bfloat16)                                  # in-kernel cast (cheap VPU)
    h = jnp.dot(x, w1_ref[...], preferred_element_type=jnp.float32) + b1_ref[...]
    h = jnp.maximum(h, 0.0).astype(jnp.bfloat16)
    h = jnp.dot(h, w2_ref[...], preferred_element_type=jnp.float32) + b2_ref[...]
    h = jnp.maximum(h, 0.0).astype(jnp.bfloat16)
    h = jnp.dot(h, w3_ref[...], preferred_element_type=jnp.float32) + b3_ref[...]
    h = jnp.maximum(h, 0.0).astype(jnp.bfloat16)
    y = jnp.dot(h, w4_ref[...], preferred_element_type=jnp.float32) + b4_ref[...]
    o_ref[...] = y[:, :OUT].astype(o_ref.dtype)                          # masked vst, ~tb/8 stores


def prepare_params(params):
    """One-time parameter prep: lane-pad the narrow tail layers (exact math:
    zero rows/cols contribute 0, ReLU(0)=0) and cast weights to bf16 / biases
    to f32 row vectors. Call once, reuse across mlp_forward calls."""
    (w1, b1), (w2, b2), (w3, b3), (w4, b4) = params
    w3p = jnp.zeros((H2, H3_PAD), jnp.float32).at[:, :H3].set(w3)
    b3p = jnp.zeros((1, H3_PAD), jnp.float32).at[:, :H3].set(jnp.reshape(b3, (1, -1)))
    w4p = jnp.zeros((H3_PAD, OUT_PAD), jnp.float32).at[:H3, :OUT].set(w4)
    b4p = jnp.zeros((1, OUT_PAD), jnp.float32).at[:, :OUT].set(jnp.reshape(b4, (1, -1)))
    weights = tuple(w.astype(jnp.bfloat16) for w in (w1, w2, w3p, w4p))
    biases = tuple(jnp.reshape(b, (1, -1)).astype(jnp.float32) for b in (b1, b2, b3p, b4p))
    return weights, biases


def _choose_tile(B, tile_b):
    """Rows per grid step: multiple of 8, capped at tile_b, and aiming for
    >= 2 grid steps when the batch allows it (v7x has 2 TensorCores)."""
    if B <= 8:
        return 8
    half_up8 = -(-(-(-B // 2)) // 8) * 8        # ceil(ceil(B/2) / 8) * 8
    return int(min(tile_b, max(8, half_up8)))


def mlp_forward(din, prepared, *, tile_b=DEFAULT_TILE_B):
    """din: any shape whose total size is a multiple of IN_DIM (the
    `view(-1, cl_num*6)` interpretation). Returns (B, 3) float32."""
    x = jnp.reshape(din, (-1, IN_DIM)).astype(jnp.float32)   # f32 into the kernel; cast in-kernel
    B = x.shape[0]
    (w1b, w2b, w3b, w4b), (b1f, b2f, b3f, b4f) = prepared

    tb = _choose_tile(B, tile_b)
    grid = (pl.cdiv(B, tb),)                                 # last block may overhang; writes clipped

    const2 = lambda shape: pl.BlockSpec(shape, lambda i: (0, 0))   # VMEM-resident params

    out = pl.pallas_call(
        _mlp_kernel,
        out_shape=jax.ShapeDtypeStruct((B, OUT), jnp.float32),
        grid=grid,
        in_specs=[
            pl.BlockSpec((tb, IN_DIM), lambda i: (i, 0)),    # streamed x tile (f32)
            const2(w1b.shape), const2(b1f.shape),
            const2(w2b.shape), const2(b2f.shape),
            const2(w3b.shape), const2(b3f.shape),
            const2(w4b.shape), const2(b4f.shape),
        ],
        out_specs=pl.BlockSpec((tb, OUT), lambda i: (i, 0)), # narrow f32 output (12 B/row writeback)
        compiler_params=pltpu.CompilerParams(
            dimension_semantics=("parallel",),               # shard batch tiles over TCs (v7x)
            vmem_limit_bytes=32 * 1024 * 1024,               # ~11 MiB footprint at tb=2048
        ),
    )(x, w1b, b1f, w2b, b2f, w3b, b3f, w4b, b4f)

    return out


def init_params(key):
    """Deterministic init mimicking nn.Linear default (uniform(-1/sqrt(in), 1/sqrt(in))).
    Weights are (in, out); biases are (1, out)."""
    dims = [(IN_DIM, H1), (H1, H2), (H2, H3), (H3, OUT)]
    params = []
    for (fan_in, fan_out) in dims:
        key, kw, kb = jax.random.split(key, 3)
        bound = 1.0 / (fan_in ** 0.5)
        w = jax.random.uniform(kw, (fan_in, fan_out), jnp.float32, -bound, bound)
        b = jax.random.uniform(kb, (1, fan_out), jnp.float32, -bound, bound)
        params.append((w, b))
    return params


def reference_forward(din, params):
    x = jnp.reshape(din, (-1, IN_DIM)).astype(jnp.float32)
    (w1, b1), (w2, b2), (w3, b3), (w4, b4) = params
    h = jnp.maximum(x @ w1 + b1, 0.0)
    h = jnp.maximum(h @ w2 + b2, 0.0)
    h = jnp.maximum(h @ w3 + b3, 0.0)
    return h @ w4 + b4


if __name__ == "__main__":
    key = jax.random.PRNGKey(0)
    key, kx = jax.random.split(key)
    # Input shaped like (batch, cl_num, 6); flattens to (-1, 120) -> (2, 120).
    x = jax.random.normal(kx, (2, CL_NUM, 6), dtype=jnp.float32)

    params = init_params(key)
    prepared = prepare_params(params)

    out = mlp_forward(x, prepared)
    out = jax.block_until_ready(out)
    ref = reference_forward(x, params)
    assert out.shape == (2, OUT)
    # bf16 MXU operands (f32 accumulation) -> looser tolerance vs the f32 reference.
    assert jnp.allclose(out, ref, atol=5e-2, rtol=5e-2)

    # Exercise the multi-step grid + overhanging last block (B=20, tb=16 -> grid=2).
    key, kx2 = jax.random.split(key)
    x2 = jax.random.normal(kx2, (20, CL_NUM, 6), dtype=jnp.float32)
    out2 = jax.block_until_ready(mlp_forward(x2, prepared, tile_b=16))
    ref2 = reference_forward(x2, params)
    assert out2.shape == (20, OUT)
    assert jnp.allclose(out2, ref2, atol=5e-2, rtol=5e-2)

    print("KERNEL_OK")
</pallas_src>

<mosaic_0001>
module attributes {stable_mosaic.version = 11 : i64} {
  func.func @_mlp_kernel(%arg0: i32, %arg1: memref<8x120xf32, #tpu.memory_space<vmem>>, %arg2: memref<120x256xbf16, #tpu.memory_space<vmem>>, %arg3: memref<1x256xf32, #tpu.memory_space<vmem>>, %arg4: memref<256x128xbf16, #tpu.memory_space<vmem>>, %arg5: memref<1x128xf32, #tpu.memory_space<vmem>>, %arg6: memref<128x128xbf16, #tpu.memory_space<vmem>>, %arg7: memref<1x128xf32, #tpu.memory_space<vmem>>, %arg8: memref<128x128xbf16, #tpu.memory_space<vmem>>, %arg9: memref<1x128xf32, #tpu.memory_space<vmem>>, %arg10: memref<8x3xf32, #tpu.memory_space<vmem>>) attributes {dimension_semantics = [#tpu.dimension_semantics<parallel>], iteration_bounds = array<i64: 1>, scalar_prefetch = 0 : i64, scratch_operands = 0 : i64, tpu.core_type = #tpu.core_type<tc>, window_params = [{transform_indices = @transform_0, window_bounds = array<i64: 8, 120>}, {pipeline_mode = #tpu.pipeline_mode<synchronous>, transform_indices = @transform_1, window_bounds = array<i64: 120, 256>}, {pipeline_mode = #tpu.pipeline_mode<synchronous>, transform_indices = @transform_2, window_bounds = array<i64: 1, 256>}, {pipeline_mode = #tpu.pipeline_mode<synchronous>, transform_indices = @transform_3, window_bounds = array<i64: 256, 128>}, {pipeline_mode = #tpu.pipeline_mode<synchronous>, transform_indices = @transform_4, window_bounds = array<i64: 1, 128>}, {pipeline_mode = #tpu.pipeline_mode<synchronous>, transform_indices = @transform_5, window_bounds = array<i64: 128, 128>}, {pipeline_mode = #tpu.pipeline_mode<synchronous>, transform_indices = @transform_6, window_bounds = array<i64: 1, 128>}, {pipeline_mode = #tpu.pipeline_mode<synchronous>, transform_indices = @transform_7, window_bounds = array<i64: 128, 128>}, {pipeline_mode = #tpu.pipeline_mode<synchronous>, transform_indices = @transform_8, window_bounds = array<i64: 1, 128>}, {transform_indices = @transform_9, window_bounds = array<i64: 8, 3>}]} {
    %c0 = arith.constant 0 : index
    %c0_0 = arith.constant 0 : index
    %0 = vector.load %arg1[%c0, %c0_0] : memref<8x120xf32, #tpu.memory_space<vmem>>, vector<8x120xf32>
    %1 = arith.truncf %0 : vector<8x120xf32> to vector<8x120xbf16>
    %c0_1 = arith.constant 0 : index
    %c0_2 = arith.constant 0 : index
    %2 = vector.load %arg2[%c0_1, %c0_2] : memref<120x256xbf16, #tpu.memory_space<vmem>>, vector<120x256xbf16>
    %cst = arith.constant dense<0.000000e+00> : vector<8x256xf32>
    %3 = tpu.matmul %1, %2, %cst {dimension_numbers = #tpu.dot_dimension_numbers<[1], [0], [0], [1], [0, 0, 1, 1], [], []>} : vector<8x120xbf16>, vector<120x256xbf16>, vector<8x256xf32> -> vector<8x256xf32>
    %c0_3 = arith.constant 0 : index
    %c0_4 = arith.constant 0 : index
    %4 = vector.load %arg3[%c0_3, %c0_4] : memref<1x256xf32, #tpu.memory_space<vmem>>, vector<1x256xf32>
    %5 = vector.broadcast %4 : vector<1x256xf32> to vector<8x256xf32>
    %6 = arith.addf %3, %5 : vector<8x256xf32>
    %cst_5 = arith.constant 0.000000e+00 : f32
    %7 = vector.broadcast %cst_5 : f32 to vector<8x256xf32>
    %8 = arith.maximumf %6, %7 : vector<8x256xf32>
    %9 = arith.truncf %8 : vector<8x256xf32> to vector<8x256xbf16>
    %c0_6 = arith.constant 0 : index
    %c0_7 = arith.constant 0 : index
    %10 = vector.load %arg4[%c0_6, %c0_7] : memref<256x128xbf16, #tpu.memory_space<vmem>>, vector<256x128xbf16>
    %cst_8 = arith.constant dense<0.000000e+00> : vector<8x128xf32>
    %11 = tpu.matmul %9, %10, %cst_8 {dimension_numbers = #tpu.dot_dimension_numbers<[1], [0], [0], [1], [0, 0, 1, 1], [], []>} : vector<8x256xbf16>, vector<256x128xbf16>, vector<8x128xf32> -> vector<8x128xf32>
    %c0_9 = arith.constant 0 : index
    %c0_10 = arith.constant 0 : index
    %12 = vector.load %arg5[%c0_9, %c0_10] : memref<1x128xf32, #tpu.memory_space<vmem>>, vector<1x128xf32>
    %13 = vector.broadcast %12 : vector<1x128xf32> to vector<8x128xf32>
    %14 = arith.addf %11, %13 : vector<8x128xf32>
    %cst_11 = arith.constant 0.000000e+00 : f32
    %15 = vector.broadcast %cst_11 : f32 to vector<8x128xf32>
    %16 = arith.maximumf %14, %15 : vector<8x128xf32>
    %17 = arith.truncf %16 : vector<8x128xf32> to vector<8x128xbf16>
    %c0_12 = arith.constant 0 : index
    %c0_13 = arith.constant 0 : index
    %18 = vector.load %arg6[%c0_12, %c0_13] : memref<128x128xbf16, #tpu.memory_space<vmem>>, vector<128x128xbf16>
    %cst_14 = arith.constant dense<0.000000e+00> : vector<8x128xf32>
    %19 = tpu.matmul %17, %18, %cst_14 {dimension_numbers = #tpu.dot_dimension_numbers<[1], [0], [0], [1], [0, 0, 1, 1], [], []>} : vector<8x128xbf16>, vector<128x128xbf16>, vector<8x128xf32> -> vector<8x128xf32>
    %c0_15 = arith.constant 0 : index
    %c0_16 = arith.constant 0 : index
    %20 = vector.load %arg7[%c0_15, %c0_16] : memref<1x128xf32, #tpu.memory_space<vmem>>, vector<1x128xf32>
    %21 = vector.broadcast %20 : vector<1x128xf32> to vector<8x128xf32>
    %22 = arith.addf %19, %21 : vector<8x128xf32>
    %cst_17 = arith.constant 0.000000e+00 : f32
    %23 = vector.broadcast %cst_17 : f32 to vector<8x128xf32>
    %24 = arith.maximumf %22, %23 : vector<8x128xf32>
    %25 = arith.truncf %24 : vector<8x128xf32> to vector<8x128xbf16>
    %c0_18 = arith.constant 0 : index
    %c0_19 = arith.constant 0 : index
    %26 = vector.load %arg8[%c0_18, %c0_19] : memref<128x128xbf16, #tpu.memory_space<vmem>>, vector<128x128xbf16>
    %cst_20 = arith.constant dense<0.000000e+00> : vector<8x128xf32>
    %27 = tpu.matmul %25, %26, %cst_20 {dimension_numbers = #tpu.dot_dimension_numbers<[1], [0], [0], [1], [0, 0, 1, 1], [], []>} : vector<8x128xbf16>, vector<128x128xbf16>, vector<8x128xf32> -> vector<8x128xf32>
    %c0_21 = arith.constant 0 : index
    %c0_22 = arith.constant 0 : index
    %28 = vector.load %arg9[%c0_21, %c0_22] : memref<1x128xf32, #tpu.memory_space<vmem>>, vector<1x128xf32>
    %29 = vector.broadcast %28 : vector<1x128xf32> to vector<8x128xf32>
    %30 = arith.addf %27, %29 : vector<8x128xf32>
    %31 = vector.extract_strided_slice %30 {offsets = [0, 0], sizes = [8, 3], strides = [1, 1]} : vector<8x128xf32> to vector<8x3xf32>
    %c0_23 = arith.constant 0 : index
    %c0_24 = arith.constant 0 : index
    %32 = vector.load %arg10[%c0_23, %c0_24] : memref<8x3xf32, #tpu.memory_space<vmem>>, vector<8x3xf32>
    tpu.vector_store %arg10[%c0_23, %c0_24], %31 {strides = array<i32>} : memref<8x3xf32, #tpu.memory_space<vmem>>, vector<8x3xf32>,
    return
  }
  func.func @transform_0(%arg0: i32) -> (i32, i32) {
    %c0_i32 = arith.constant 0 : i32
    %c0_i32_0 = arith.constant 0 : i32
    return %arg0, %c0_i32 : i32, i32
  }
  func.func @transform_1(%arg0: i32) -> (i32, i32) {
    %c0_i32 = arith.constant 0 : i32
    %c0_i32_0 = arith.constant 0 : i32
    %c0_i32_1 = arith.constant 0 : i32
    return %c0_i32, %c0_i32_0 : i32, i32
  }
  func.func @transform_2(%arg0: i32) -> (i32, i32) {
    %c0_i32 = arith.constant 0 : i32
    %c0_i32_0 = arith.constant 0 : i32
    %c0_i32_1 = arith.constant 0 : i32
    return %c0_i32, %c0_i32_0 : i32, i32
  }
  func.func @transform_3(%arg0: i32) -> (i32, i32) {
    %c0_i32 = arith.constant 0 : i32
    %c0_i32_0 = arith.constant 0 : i32
    %c0_i32_1 = arith.constant 0 : i32
    return %c0_i32, %c0_i32_0 : i32, i32
  }
  func.func @transform_4(%arg0: i32) -> (i32, i32) {
    %c0_i32 = arith.constant 0 : i32
    %c0_i32_0 = arith.constant 0 : i32
    %c0_i32_1 = arith.constant 0 : i32
    return %c0_i32, %c0_i32_0 : i32, i32
  }
  func.func @transform_5(%arg0: i32) -> (i32, i32) {
    %c0_i32 = arith.constant 0 : i32
    %c0_i32_0 = arith.constant 0 : i32
    %c0_i32_1 = arith.constant 0 : i32
    return %c0_i32, %c0_i32_0 : i32, i32
  }
  func.func @transform_6(%arg0: i32) -> (i32, i32) {
    %c0_i32 = arith.constant 0 : i32
    %c0_i32_0 = arith.constant 0 : i32
    %c0_i32_1 = arith.constant 0 : i32
    return %c0_i32, %c0_i32_0 : i32, i32
  }
  func.func @transform_7(%arg0: i32) -> (i32, i32) {
    %c0_i32 = arith.constant 0 : i32
    %c0_i32_0 = arith.constant 0 : i32
    %c0_i32_1 = arith.constant 0 : i32
    return %c0_i32, %c0_i32_0 : i32, i32
  }
  func.func @transform_8(%arg0: i32) -> (i32, i32) {
    %c0_i32 = arith.constant 0 : i32
    %c0_i32_0 = arith.constant 0 : i32
    %c0_i32_1 = arith.constant 0 : i32
    return %c0_i32, %c0_i32_0 : i32, i32
  }
  func.func @transform_9(%arg0: i32) -> (i32, i32) {
    %c0_i32 = arith.constant 0 : i32
    %c0_i32_0 = arith.constant 0 : i32
    return %arg0, %c0_i32 : i32, i32
  }
}

</mosaic_0001>

<llo_original>
// kernel: tpu_custom_call.1
$region0: #{tpu_custom_call.1}
  #allocation0 [shape = 'u32[]', space=smem, size = 0x4, offset = 0x4, fixed_abs, tag = 'smem constant byte address 0x4 - core index']
  #allocation1 [shape = 'u32[72,128]{1,0:T(1,128)}', space=vmem, size = 0x9000, scoped, tag = 'internal scratch']
  %s0 = inlined_call_operand.hbm [shape: f32[2,120], index: 0, kind: input, shape index: {}]
  %s1 = inlined_call_operand.hbm [shape: bf16[120,256], index: 1, kind: input, shape index: {}]
  %s2 = inlined_call_operand.hbm [shape: f32[1,256], index: 2, kind: input, shape index: {}]
  %s3 = inlined_call_operand.hbm [shape: bf16[256,128], index: 3, kind: input, shape index: {}]
  %s4 = inlined_call_operand.vmem [shape: f32[1,128], index: 4, kind: input, shape index: {}]
  %s5 = inlined_call_operand.hbm [shape: bf16[128,128], index: 5, kind: input, shape index: {}]
  %s6 = inlined_call_operand.vmem [shape: f32[1,128], index: 6, kind: input, shape index: {}]
  %s7 = inlined_call_operand.hbm [shape: bf16[128,128], index: 7, kind: input, shape index: {}]
  %s8 = inlined_call_operand.vmem [shape: f32[1,128], index: 8, kind: input, shape index: {}]
  %s9 = inlined_call_operand.hbm [shape: f32[2,3], index: 9, kind: output, shape index: {}]
  %s10 = sld [smem:[#allocation0]]
  $region70: #{tpu_custom_call.1} parent=0
    _
  %s12 = ssub.s32 1, %s10
  %s13 = scalar_select 0, %s12, %s10
  $region1: #{tpu_custom_call.1} parent=0
    #allocation2 [shape = 'u8[4096]{0}', space=vmem, size = 0x1000, scoped, tag = 'input window, operand 0, single buffered']
    #allocation3 [shape = 's32[1]{0}', space=sflag, size = 0x4, scoped, tag = 'scoped memory for tpu_custom_call.1']
    #allocation4 [shape = 's32[1]{0}', space=sflag, size = 0x4, scoped, tag = 'scoped memory for tpu_custom_call.1']
    #allocation5 [shape = 'u8[61440]{0}', space=vmem, size = 0xf000, scoped, tag = 'input window, operand 1, single buffered']
    #allocation6 [shape = 's32[1]{0}', space=sflag, size = 0x4, scoped, tag = 'scoped memory for tpu_custom_call.1']
    #allocation7 [shape = 'u8[1024]{0}', space=vmem, size = 0x400, scoped, tag = 'input window, operand 2, single buffered']
    #allocation8 [shape = 'u8[65536]{0}', space=vmem, size = 0x10000, scoped, tag = 'input window, operand 3, single buffered']
    #allocation9 [shape = 's32[1]{0}', space=sflag, size = 0x4, scoped, tag = 'scoped memory for tpu_custom_call.1']
    #allocation10 [shape = 'u8[32768]{0}', space=vmem, size = 0x8000, scoped, tag = 'input window, operand 5, single buffered']
    #allocation11 [shape = 'u8[32768]{0}', space=vmem, size = 0x8000, scoped, tag = 'input window, operand 7, single buffered']
    #allocation12 [shape = 's32[1]{0}', space=sflag, size = 0x4, scoped, tag = 'scoped memory for tpu_custom_call.1']
    #allocation13 [shape = 'u8[4096]{0}', space=vmem, size = 0x1000, scoped, tag = 'output window, operand 0, single buffered']
    %14 = vsyncpa [#allocation3], 0
    %15 = vsyncpa [#allocation6], 0
    %16 = vsyncpa [#allocation9], 0
    %17 = vsyncpa [#allocation12], 0
    %18 = vsyncpa [#allocation4], 0
    // Predicated region
    $region2: #{tpu_custom_call.1} parent=1 // pred_check
      _
    $region3: #{tpu_custom_call.1} parent=1 // pred_check_branch
      %20 = sbr.rel (0) target = $region5
    $region4: #{tpu_custom_call.1} parent=1 // pred_region
      %22 = vsyncadd [#allocation3], 96
      %s23 = sshll.u32 %s0, 4
      %s24 = int_to_ptr.hbm [resolvable:$true] %s23
      %s25 = sshll.u32 [#allocation2], 4
      %s26 = int_to_ptr.vmem [resolvable:$true] %s25
      %31 = dma.hbm_to_vmem [thread:$0]  %s24, 32, %s26, [#allocation3], 32, 32, 2
    $region5: #{tpu_custom_call.1} parent=1 // pred_fallthru
      _
    // Predicated region
    $region6: #{tpu_custom_call.1} parent=1 // pred_check
      _
    $region7: #{tpu_custom_call.1} parent=1 // pred_check_branch
      %33 = sbr.rel (0) target = $region9
    $region8: #{tpu_custom_call.1} parent=1 // pred_region
      %35 = vsyncadd [#allocation6], 0
      %s36 = sshll.u32 %s1, 4
      %s37 = int_to_ptr.hbm [resolvable:$true] %s36
      %s38 = sshll.u32 [#allocation5], 4
      %s39 = int_to_ptr.vmem [resolvable:$true] %s38
      %44 = dma.hbm_to_vmem [thread:$0]  %s37, 1920, %s39, [#allocation6], 128, 128, 8
    $region9: #{tpu_custom_call.1} parent=1 // pred_fallthru
      _
    // Predicated region
    $region10: #{tpu_custom_call.1} parent=1 // pred_check
      _
    $region11: #{tpu_custom_call.1} parent=1 // pred_check_branch
      %46 = sbr.rel (0) target = $region13
    $region12: #{tpu_custom_call.1} parent=1 // pred_region
      %48 = vsyncadd [#allocation6], 0
      %s50 = sshll.u32 %s2, 4
      %s51 = int_to_ptr.hbm [resolvable:$true] %s50
      %s52 = sshll.u32 [#allocation7], 4
      %s53 = int_to_ptr.vmem [resolvable:$true] %s52
      %55 = dma.hbm_to_vmem [thread:$0]  %s51, 32, %s53, [#allocation6]
    $region13: #{tpu_custom_call.1} parent=1 // pred_fallthru
      _
    // Predicated region
    $region14: #{tpu_custom_call.1} parent=1 // pred_check
      _
    $region15: #{tpu_custom_call.1} parent=1 // pred_check_branch
      %57 = sbr.rel (0) target = $region17
    $region16: #{tpu_custom_call.1} parent=1 // pred_region
      %59 = vsyncadd [#allocation9], 0
      %s60 = sshll.u32 %s3, 4
      %s61 = int_to_ptr.hbm [resolvable:$true] %s60
      %s62 = sshll.u32 [#allocation8], 4
      %s63 = int_to_ptr.vmem [resolvable:$true] %s62
      %68 = dma.hbm_to_vmem [thread:$0]  %s61, 2048, %s63, [#allocation9], 64, 64, 4
    $region17: #{tpu_custom_call.1} parent=1 // pred_fallthru
      _
    // Predicated region
    $region18: #{tpu_custom_call.1} parent=1 // pred_check
      _
    $region19: #{tpu_custom_call.1} parent=1 // pred_check_branch
      %70 = sbr.rel (0) target = $region21
    $region20: #{tpu_custom_call.1} parent=1 // pred_region
      _
    $region21: #{tpu_custom_call.1} parent=1 // pred_fallthru
      _
    // Predicated region
    $region22: #{tpu_custom_call.1} parent=1 // pred_check
      _
    $region23: #{tpu_custom_call.1} parent=1 // pred_check_branch
      %72 = sbr.rel (0) target = $region25
    $region24: #{tpu_custom_call.1} parent=1 // pred_region
      %74 = vsyncadd [#allocation9], 0
      %s75 = sshll.u32 %s5, 4
      %s76 = int_to_ptr.hbm [resolvable:$true] %s75
      %s77 = sshll.u32 [#allocation10], 4
      %s78 = int_to_ptr.vmem [resolvable:$true] %s77
      %83 = dma.hbm_to_vmem [thread:$0]  %s76, 1024, %s78, [#allocation9], 64, 64, 4
    $region25: #{tpu_custom_call.1} parent=1 // pred_fallthru
      _
    // Predicated region
    $region26: #{tpu_custom_call.1} parent=1 // pred_check
      _
    $region27: #{tpu_custom_call.1} parent=1 // pred_check_branch
      %85 = sbr.rel (0) target = $region29
    $region28: #{tpu_custom_call.1} parent=1 // pred_region
      _
    $region29: #{tpu_custom_call.1} parent=1 // pred_fallthru
      _
    // Predicated region
    $region30: #{tpu_custom_call.1} parent=1 // pred_check
      _
    $region31: #{tpu_custom_call.1} parent=1 // pred_check_branch
      %87 = sbr.rel (0) target = $region33
    $region32: #{tpu_custom_call.1} parent=1 // pred_region
      %89 = vsyncadd [#allocation12], 0
      %s90 = sshll.u32 %s7, 4
      %s91 = int_to_ptr.hbm [resolvable:$true] %s90
      %s92 = sshll.u32 [#allocation11], 4
      %s93 = int_to_ptr.vmem [resolvable:$true] %s92
      %98 = dma.hbm_to_vmem [thread:$0]  %s91, 1024, %s93, [#allocation12], 64, 64, 4
    $region33: #{tpu_custom_call.1} parent=1 // pred_fallthru
      _
    // Predicated region
    $region34: #{tpu_custom_call.1} parent=1 // pred_check
      _
    $region35: #{tpu_custom_call.1} parent=1 // pred_check_branch
      %100 = sbr.rel (0) target = $region37
    $region36: #{tpu_custom_call.1} parent=1 // pred_region
      _
    $region37: #{tpu_custom_call.1} parent=1 // pred_fallthru
      _
    // Predicated region
    $region38: #{tpu_custom_call.1} parent=1 // pred_check
      _
    $region39: #{tpu_custom_call.1} parent=1 // pred_check_branch
      %102 = sbr.rel (0) target = $region41
    $region40: #{tpu_custom_call.1} parent=1 // pred_region
      %104 = dma.done [#allocation3], 128
    $region41: #{tpu_custom_call.1} parent=1 // pred_fallthru
      _
    // Predicated region
    $region42: #{tpu_custom_call.1} parent=1 // pred_check
      _
    $region43: #{tpu_custom_call.1} parent=1 // pred_check_branch
      %106 = sbr.rel (0) target = $region45
    $region44: #{tpu_custom_call.1} parent=1 // pred_region
      %108 = dma.done [#allocation6], 1920
    $region45: #{tpu_custom_call.1} parent=1 // pred_fallthru
      _
    // Predicated region
    $region46: #{tpu_custom_call.1} parent=1 // pred_check
      _
    $region47: #{tpu_custom_call.1} parent=1 // pred_check_branch
      %110 = sbr.rel (0) target = $region49
    $region48: #{tpu_custom_call.1} parent=1 // pred_region
      %112 = dma.done [#allocation6], 32
    $region49: #{tpu_custom_call.1} parent=1 // pred_fallthru
      _
    // Predicated region
    $region50: #{tpu_custom_call.1} parent=1 // pred_check
      _
    $region51: #{tpu_custom_call.1} parent=1 // pred_check_branch
      %114 = sbr.rel (0) target = $region53
    $region52: #{tpu_custom_call.1} parent=1 // pred_region
      %116 = dma.done [#allocation9], 2048
    $region53: #{tpu_custom_call.1} parent=1 // pred_fallthru
      _
    // Predicated region
    $region54: #{tpu_custom_call.1} parent=1 // pred_check
      _
    $region55: #{tpu_custom_call.1} parent=1 // pred_check_branch
      %118 = sbr.rel (0) target = $region57
    $region56: #{tpu_custom_call.1} parent=1 // pred_region
      %120 = dma.done [#allocation9], 1024
    $region57: #{tpu_custom_call.1} parent=1 // pred_fallthru
      _
    // Predicated region
    $region58: #{tpu_custom_call.1} parent=1 // pred_check
      _
    $region59: #{tpu_custom_call.1} parent=1 // pred_check_branch
      %122 = sbr.rel (0) target = $region61
    $region60: #{tpu_custom_call.1} parent=1 // pred_region
      %124 = dma.done [#allocation12], 1024
    $region61: #{tpu_custom_call.1} parent=1 // pred_fallthru
      _
    %v125 = vld [vmem:[#allocation2] sm:$0xff]
    %v126 = vpack.c.bf16 %v125, %v125
    %v127 = vld [vmem:[#allocation5] sm:$0xff]
    %v128 = vld [vmem:[#allocation5 + $0x8] sm:$0xff]
    %v129 = vld [vmem:[#allocation5 + $0x10] sm:$0xff]
    %v130 = vld [vmem:[#allocation5 + $0x18] sm:$0xff]
    %v131 = vld [vmem:[#allocation5 + $0x20] sm:$0xff]
    %v132 = vld [vmem:[#allocation5 + $0x28] sm:$0xff]
    %v133 = vld [vmem:[#allocation5 + $0x30] sm:$0xff]
    %v134 = vld [vmem:[#allocation5 + $0x38] sm:$0xff]
    %v135 = vld [vmem:[#allocation5 + $0x40] sm:$0xff]
    %v136 = vld [vmem:[#allocation5 + $0x48] sm:$0xff]
    %v137 = vld [vmem:[#allocation5 + $0x50] sm:$0xff]
    %v138 = vld [vmem:[#allocation5 + $0x58] sm:$0xff]
    %v139 = vld [vmem:[#allocation5 + $0x60] sm:$0xff]
    %v140 = vld [vmem:[#allocation5 + $0x68] sm:$0xff]
    %v141 = vld [vmem:[#allocation5 + $0x70] sm:$0xff]
    %v142 = vld [vmem:[#allocation7] sm:$0x3]
    %v144 = vperm.slane %v142, 0
    %v145 = vperm.slane %v142, 1
    %v163 = vunpack.c.l.b16 %v127
    %v164 = vunpack.c.h.b16 %v127
    %v165 = vunpack.c.l.b16 %v128
    %v166 = vunpack.c.h.b16 %v128
    %v167 = vunpack.c.l.b16 %v129
    %v168 = vunpack.c.h.b16 %v129
    %v169 = vunpack.c.l.b16 %v130
    %v170 = vunpack.c.h.b16 %v130
    %v171 = vunpack.c.l.b16 %v131
    %v172 = vunpack.c.h.b16 %v131
    %v173 = vunpack.c.l.b16 %v132
    %v174 = vunpack.c.h.b16 %v132
    %v175 = vunpack.c.l.b16 %v133
    %v176 = vunpack.c.h.b16 %v133
    %v177 = vunpack.c.l.b16 %v134
    %v178 = vunpack.c.h.b16 %v134
    %v179 = vunpack.c.l.b16 %v135
    %v180 = vunpack.c.h.b16 %v135
    %v181 = vunpack.c.l.b16 %v136
    %v182 = vunpack.c.h.b16 %v136
    %v183 = vunpack.c.l.b16 %v137
    %v184 = vunpack.c.h.b16 %v137
    %v185 = vunpack.c.l.b16 %v138
    %v186 = vunpack.c.h.b16 %v138
    %v187 = vunpack.c.l.b16 %v139
    %v188 = vunpack.c.h.b16 %v139
    %v189 = vunpack.c.l.b16 %v140
    %v190 = vunpack.c.h.b16 %v140
    %v191 = vunpack.c.l.b16 %v141
    %v192 = vunpack.c.h.b16 %v141
    %v193 = vpack.c.b16 %v165, %v163
    %v194 = vpack.c.b16 %v166, %v164
    %v195 = vpack.c.b16 %v169, %v167
    %v196 = vpack.c.b16 %v170, %v168
    %v197 = vpack.c.b16 %v173, %v171
    %v198 = vpack.c.b16 %v174, %v172
    %v199 = vpack.c.b16 %v177, %v175
    %v200 = vpack.c.b16 %v178, %v176
    %v201 = vpack.c.b16 %v181, %v179
    %v202 = vpack.c.b16 %v182, %v180
    %v203 = vpack.c.b16 %v185, %v183
    %v204 = vpack.c.b16 %v186, %v184
    %v205 = vpack.c.b16 %v189, %v187
    %v206 = vpack.c.b16 %v190, %v188
    %v207 = vpack.c.b16 %v191, %v191
    %v208 = vpack.c.b16 %v192, %v192
    %vm223 = vcmask 982016
    %v225 = vsel %vm223, %v126, 0
    %vm227 = vcmask 1043456
    %v229 = vsel %vm227, %v207, 0
    %v232 = vsel %vm227, %v208, 0
    %234 = vmatpush.bf16.msra.mxu0 %v229
    %235 = vmatpush.bf16.msra.mxu0 %v205
    %236 = vmatpush.bf16.msra.mxu0 %v203
    %237 = vmatpush.bf16.msra.mxu0 %v201
    %238 = vmatpush.bf16.msra.mxu0 %v199
    %239 = vmatpush.bf16.msra.mxu0 %v197
    %240 = vmatpush.bf16.msra.mxu0 %v195
    %241 = vmatpush.bf16.msra.mxu0 %v193
    %242 = vmatmul.bf16.gmra.mxu0 %v225
    %v243 = vpop.f32.mrf.mxu0
    %v244 = vadd.f32 %v144, %v243
    %v245 = vpop.f32.mrf.mxu0
    %246 = vdwg.mxu0
    %247 = vmatpush.bf16.msra.mxu0 %v232
    %248 = vmatpush.bf16.msra.mxu0 %v206
    %249 = vmatpush.bf16.msra.mxu0 %v204
    %250 = vmatpush.bf16.msra.mxu0 %v202
    %251 = vmatpush.bf16.msra.mxu0 %v200
    %252 = vmatpush.bf16.msra.mxu0 %v198
    %253 = vmatpush.bf16.msra.mxu0 %v196
    %254 = vmatpush.bf16.msra.mxu0 %v194
    %255 = vmatmul.bf16.gmra.mxu0 %v225
    %v256 = vpop.f32.mrf.mxu0
    %v257 = vadd.f32 %v145, %v256
    %v258 = vpop.f32.mrf.mxu0
    %259 = vdwg.mxu0
    %v260 = vmax.f32 %v244, 0.0
    %v261 = vmax.f32 %v257, 0.0
    %v262 = vpack.c.bf16 %v260, %v260
    %v263 = vpack.c.bf16 %v261, %v261
    %v264 = vld [vmem:[#allocation8] sm:$0xf]
    %v265 = vld [vmem:[#allocation8 + $0x4] sm:$0xf]
    %v266 = vld [vmem:[#allocation8 + $0x8] sm:$0xf]
    %v267 = vld [vmem:[#allocation8 + $0xc] sm:$0xf]
    %v268 = vld [vmem:[#allocation8 + $0x10] sm:$0xf]
    %v269 = vld [vmem:[#allocation8 + $0x14] sm:$0xf]
    %v270 = vld [vmem:[#allocation8 + $0x18] sm:$0xf]
    %v271 = vld [vmem:[#allocation8 + $0x1c] sm:$0xf]
    %v272 = vld [vmem:[#allocation8 + $0x20] sm:$0xf]
    %v273 = vld [vmem:[#allocation8 + $0x24] sm:$0xf]
    %v274 = vld [vmem:[#allocation8 + $0x28] sm:$0xf]
    %v275 = vld [vmem:[#allocation8 + $0x2c] sm:$0xf]
    %v276 = vld [vmem:[#allocation8 + $0x30] sm:$0xf]
    %v277 = vld [vmem:[#allocation8 + $0x34] sm:$0xf]
    %v278 = vld [vmem:[#allocation8 + $0x38] sm:$0xf]
    %v279 = vld [vmem:[#allocation8 + $0x3c] sm:$0xf]
    %v280 = vld [vmem:[#allocation8 + $0x40] sm:$0xf]
    %v281 = vld [vmem:[#allocation8 + $0x44] sm:$0xf]
    %v282 = vld [vmem:[#allocation8 + $0x48] sm:$0xf]
    %v283 = vld [vmem:[#allocation8 + $0x4c] sm:$0xf]
    %v284 = vld [vmem:[#allocation8 + $0x50] sm:$0xf]
    %v285 = vld [vmem:[#allocation8 + $0x54] sm:$0xf]
    %v286 = vld [vmem:[#allocation8 + $0x58] sm:$0xf]
    %v287 = vld [vmem:[#allocation8 + $0x5c] sm:$0xf]
    %v288 = vld [vmem:[#allocation8 + $0x60] sm:$0xf]
    %v289 = vld [vmem:[#allocation8 + $0x64] sm:$0xf]
    %v290 = vld [vmem:[#allocation8 + $0x68] sm:$0xf]
    %v291 = vld [vmem:[#allocation8 + $0x6c] sm:$0xf]
    %v292 = vld [vmem:[#allocation8 + $0x70] sm:$0xf]
    %v293 = vld [vmem:[#allocation8 + $0x74] sm:$0xf]
    %v294 = vld [vmem:[#allocation8 + $0x78] sm:$0xf]
    %v295 = vld [vmem:[#allocation8 + $0x7c] sm:$0xf]
    %v296 = vld [vmem:[%s4] sm:$0x1]
    %v298 = vperm.slane %v296, 0
    %v332 = vunpack.c.l.b16 %v264
    %v333 = vunpack.c.l.b16 %v265
    %v334 = vunpack.c.l.b16 %v266
    %v335 = vunpack.c.l.b16 %v267
    %v336 = vunpack.c.l.b16 %v268
    %v337 = vunpack.c.l.b16 %v269
    %v338 = vunpack.c.l.b16 %v270
    %v339 = vunpack.c.l.b16 %v271
    %v340 = vunpack.c.l.b16 %v272
    %v341 = vunpack.c.l.b16 %v273
    %v342 = vunpack.c.l.b16 %v274
    %v343 = vunpack.c.l.b16 %v275
    %v344 = vunpack.c.l.b16 %v276
    %v345 = vunpack.c.l.b16 %v277
    %v346 = vunpack.c.l.b16 %v278
    %v347 = vunpack.c.l.b16 %v279
    %v348 = vunpack.c.l.b16 %v280
    %v349 = vunpack.c.l.b16 %v281
    %v350 = vunpack.c.l.b16 %v282
    %v351 = vunpack.c.l.b16 %v283
    %v352 = vunpack.c.l.b16 %v284
    %v353 = vunpack.c.l.b16 %v285
    %v354 = vunpack.c.l.b16 %v286
    %v355 = vunpack.c.l.b16 %v287
    %v356 = vunpack.c.l.b16 %v288
    %v357 = vunpack.c.l.b16 %v289
    %v358 = vunpack.c.l.b16 %v290
    %v359 = vunpack.c.l.b16 %v291
    %v360 = vunpack.c.l.b16 %v292
    %v361 = vunpack.c.l.b16 %v293
    %v362 = vunpack.c.l.b16 %v294
    %v363 = vunpack.c.l.b16 %v295
    %v364 = vpack.c.b16 %v333, %v332
    %v365 = vpack.c.b16 %v335, %v334
    %v366 = vpack.c.b16 %v337, %v336
    %v367 = vpack.c.b16 %v339, %v338
    %v368 = vpack.c.b16 %v341, %v340
    %v369 = vpack.c.b16 %v343, %v342
    %v370 = vpack.c.b16 %v345, %v344
    %v371 = vpack.c.b16 %v347, %v346
    %v372 = vpack.c.b16 %v349, %v348
    %v373 = vpack.c.b16 %v351, %v350
    %v374 = vpack.c.b16 %v353, %v352
    %v375 = vpack.c.b16 %v355, %v354
    %v376 = vpack.c.b16 %v357, %v356
    %v377 = vpack.c.b16 %v359, %v358
    %v378 = vpack.c.b16 %v361, %v360
    %v379 = vpack.c.b16 %v363, %v362
    %396 = vmatpush.bf16.msra.mxu0 %v371
    %397 = vmatpush.bf16.msra.mxu0 %v370
    %398 = vmatpush.bf16.msra.mxu0 %v369
    %399 = vmatpush.bf16.msra.mxu0 %v368
    %400 = vmatpush.bf16.msra.mxu0 %v367
    %401 = vmatpush.bf16.msra.mxu0 %v366
    %402 = vmatpush.bf16.msra.mxu0 %v365
    %403 = vmatpush.bf16.msra.mxu0 %v364
    %404 = vmatmul.bf16.gmra.mxu0 %v262
    %v405 = vpop.f32.mrf.mxu0
    %v406 = vadd.f32 %v298, %v405
    %v407 = vpop.f32.mrf.mxu0
    %408 = vdwg.mxu0
    %409 = vmatpush.bf16.msra.mxu0 %v379
    %410 = vmatpush.bf16.msra.mxu0 %v378
    %411 = vmatpush.bf16.msra.mxu0 %v377
    %412 = vmatpush.bf16.msra.mxu0 %v376
    %413 = vmatpush.bf16.msra.mxu0 %v375
    %414 = vmatpush.bf16.msra.mxu0 %v374
    %415 = vmatpush.bf16.msra.mxu0 %v373
    %416 = vmatpush.bf16.msra.mxu0 %v372
    %417 = vmatmul.bf16.gmra.mxu0 %v263
    %v418 = vpop.f32.mrf.mxu0
    %v419 = vadd.f32 %v406, %v418
    %v420 = vpop.f32.mrf.mxu0
    %421 = vdwg.mxu0
    %v422 = vmax.f32 %v419, 0.0
    %v423 = vpack.c.bf16 %v422, %v422
    %v424 = vld [vmem:[#allocation10] sm:$0xf]
    %v425 = vld [vmem:[#allocation10 + $0x4] sm:$0xf]
    %v426 = vld [vmem:[#allocation10 + $0x8] sm:$0xf]
    %v427 = vld [vmem:[#allocation10 + $0xc] sm:$0xf]
    %v428 = vld [vmem:[#allocation10 + $0x10] sm:$0xf]
    %v429 = vld [vmem:[#allocation10 + $0x14] sm:$0xf]
    %v430 = vld [vmem:[#allocation10 + $0x18] sm:$0xf]
    %v431 = vld [vmem:[#allocation10 + $0x1c] sm:$0xf]
    %v432 = vld [vmem:[#allocation10 + $0x20] sm:$0xf]
    %v433 = vld [vmem:[#allocation10 + $0x24] sm:$0xf]
    %v434 = vld [vmem:[#allocation10 + $0x28] sm:$0xf]
    %v435 = vld [vmem:[#allocation10 + $0x2c] sm:$0xf]
    %v436 = vld [vmem:[#allocation10 + $0x30] sm:$0xf]
    %v437 = vld [vmem:[#allocation10 + $0x34] sm:$0xf]
    %v438 = vld [vmem:[#allocation10 + $0x38] sm:$0xf]
    %v439 = vld [vmem:[#allocation10 + $0x3c] sm:$0xf]
    %v440 = vld [vmem:[%s6] sm:$0x1]
    %v442 = vperm.slane %v440, 0
    %v460 = vunpack.c.l.b16 %v424
    %v461 = vunpack.c.l.b16 %v425
    %v462 = vunpack.c.l.b16 %v426
    %v463 = vunpack.c.l.b16 %v427
    %v464 = vunpack.c.l.b16 %v428
    %v465 = vunpack.c.l.b16 %v429
    %v466 = vunpack.c.l.b16 %v430
    %v467 = vunpack.c.l.b16 %v431
    %v468 = vunpack.c.l.b16 %v432
    %v469 = vunpack.c.l.b16 %v433
    %v470 = vunpack.c.l.b16 %v434
    %v471 = vunpack.c.l.b16 %v435
    %v472 = vunpack.c.l.b16 %v436
    %v473 = vunpack.c.l.b16 %v437
    %v474 = vunpack.c.l.b16 %v438
    %v475 = vunpack.c.l.b16 %v439
    %v476 = vpack.c.b16 %v461, %v460
    %v477 = vpack.c.b16 %v463, %v462
    %v478 = vpack.c.b16 %v465, %v464
    %v479 = vpack.c.b16 %v467, %v466
    %v480 = vpack.c.b16 %v469, %v468
    %v481 = vpack.c.b16 %v471, %v470
    %v482 = vpack.c.b16 %v473, %v472
    %v483 = vpack.c.b16 %v475, %v474
    %492 = vmatpush.bf16.msra.mxu0 %v483
    %493 = vmatpush.bf16.msra.mxu0 %v482
    %494 = vmatpush.bf16.msra.mxu0 %v481
    %495 = vmatpush.bf16.msra.mxu0 %v480
    %496 = vmatpush.bf16.msra.mxu0 %v479
    %497 = vmatpush.bf16.msra.mxu0 %v478
    %498 = vmatpush.bf16.msra.mxu0 %v477
    %499 = vmatpush.bf16.msra.mxu0 %v476
    %500 = vmatmul.bf16.gmra.mxu0 %v423
    %v501 = vpop.f32.mrf.mxu0
    %v502 = vadd.f32 %v442, %v501
    %v503 = vpop.f32.mrf.mxu0
    %504 = vdwg.mxu0
    %v505 = vmax.f32 %v502, 0.0
    %v506 = vpack.c.bf16 %v505, %v505
    %v507 = vld [vmem:[#allocation11] sm:$0xf]
    %v508 = vld [vmem:[#allocation11 + $0x4] sm:$0xf]
    %v509 = vld [vmem:[#allocation11 + $0x8] sm:$0xf]
    %v510 = vld [vmem:[#allocation11 + $0xc] sm:$0xf]
    %v511 = vld [vmem:[#allocation11 + $0x10] sm:$0xf]
    %v512 = vld [vmem:[#allocation11 + $0x14] sm:$0xf]
    %v513 = vld [vmem:[#allocation11 + $0x18] sm:$0xf]
    %v514 = vld [vmem:[#allocation11 + $0x1c] sm:$0xf]
    %v515 = vld [vmem:[#allocation11 + $0x20] sm:$0xf]
    %v516 = vld [vmem:[#allocation11 + $0x24] sm:$0xf]
    %v517 = vld [vmem:[#allocation11 + $0x28] sm:$0xf]
    %v518 = vld [vmem:[#allocation11 + $0x2c] sm:$0xf]
    %v519 = vld [vmem:[#allocation11 + $0x30] sm:$0xf]
    %v520 = vld [vmem:[#allocation11 + $0x34] sm:$0xf]
    %v521 = vld [vmem:[#allocation11 + $0x38] sm:$0xf]
    %v522 = vld [vmem:[#allocation11 + $0x3c] sm:$0xf]
    %v523 = vld [vmem:[%s8] sm:$0x1]
    %v525 = vperm.slane %v523, 0
    %v543 = vunpack.c.l.b16 %v507
    %v544 = vunpack.c.l.b16 %v508
    %v545 = vunpack.c.l.b16 %v509
    %v546 = vunpack.c.l.b16 %v510
    %v547 = vunpack.c.l.b16 %v511
    %v548 = vunpack.c.l.b16 %v512
    %v549 = vunpack.c.l.b16 %v513
    %v550 = vunpack.c.l.b16 %v514
    %v551 = vunpack.c.l.b16 %v515
    %v552 = vunpack.c.l.b16 %v516
    %v553 = vunpack.c.l.b16 %v517
    %v554 = vunpack.c.l.b16 %v518
    %v555 = vunpack.c.l.b16 %v519
    %v556 = vunpack.c.l.b16 %v520
    %v557 = vunpack.c.l.b16 %v521
    %v558 = vunpack.c.l.b16 %v522
    %v559 = vpack.c.b16 %v544, %v543
    %v560 = vpack.c.b16 %v546, %v545
    %v561 = vpack.c.b16 %v548, %v547
    %v562 = vpack.c.b16 %v550, %v549
    %v563 = vpack.c.b16 %v552, %v551
    %v564 = vpack.c.b16 %v554, %v553
    %v565 = vpack.c.b16 %v556, %v555
    %v566 = vpack.c.b16 %v558, %v557
    %575 = vmatpush.bf16.msra.mxu0 %v566
    %576 = vmatpush.bf16.msra.mxu0 %v565
    %577 = vmatpush.bf16.msra.mxu0 %v564
    %578 = vmatpush.bf16.msra.mxu0 %v563
    %579 = vmatpush.bf16.msra.mxu0 %v562
    %580 = vmatpush.bf16.msra.mxu0 %v561
    %581 = vmatpush.bf16.msra.mxu0 %v560
    %582 = vmatpush.bf16.msra.mxu0 %v559
    %583 = vmatmul.bf16.gmra.mxu0 %v506
    %v584 = vpop.f32.mrf.mxu0
    %v585 = vadd.f32 %v525, %v584
    %v586 = vpop.f32.mrf.mxu0
    %587 = vdwg.mxu0
    %vm588 = vcmask 23552
    %589 = vst.msk [vmem:[#allocation13] sm:$0xff] %vm588, %v585
    // Predicated region
    $region62: #{tpu_custom_call.1} parent=1 // pred_check
      _
    $region63: #{tpu_custom_call.1} parent=1 // pred_check_branch
      %591 = sbr.rel (0) target = $region65
    $region64: #{tpu_custom_call.1} parent=1 // pred_region
      %593 = vsyncadd [#allocation4], 96
      %s594 = sshll.u32 [#allocation13], 4
      %s595 = int_to_ptr.vmem [resolvable:$true] %s594
      %s596 = sshll.u32 %s9, 4
      %s597 = int_to_ptr.hbm [resolvable:$true] %s596
      %602 = dma.vmem_to_hbm [thread:$0]  %s595, 32, %s597, [#allocation4], 32, 32, 2
    $region65: #{tpu_custom_call.1} parent=1 // pred_fallthru
      _
    // Predicated region
    $region66: #{tpu_custom_call.1} parent=1 // pred_check
      _
    $region67: #{tpu_custom_call.1} parent=1 // pred_check_branch
      %604 = sbr.rel (0) target = $region69
    $region68: #{tpu_custom_call.1} parent=1 // pred_region
      %606 = dma.done [#allocation4], 128
    $region69: #{tpu_custom_call.1} parent=1 // pred_fallthru
      _
    %607 = vsyncpa [#allocation3], 1
    %608 = vsyncpa [#allocation6], 1
    %609 = vsyncpa [#allocation9], 1
    %610 = vsyncpa [#allocation12], 1
    %611 = vsyncpa [#allocation4], 1

</llo_original>
